<compile_context>
chip_gen: v5e
topology: v5e:2x2
jax: 0.10.0
libtpu: 0.0.40
codegen_flags: <defaults>
</compile_context>

<pallas_src>
import jax
import jax.numpy as jnp
from jax import lax
from jax.experimental import pallas as pl
from jax.experimental.pallas import tpu as pltpu


def _round_up(x, m):
    return ((x + m - 1) // m) * m


def _conv_matmul_kernel(p_ref, w_ref, o_ref, acc_ref):
    # p_ref:   (tm, tk)  patch tile   (batch dim squeezed out)
    # w_ref:   (tk, tn)  weight tile
    # o_ref:   (tm, tn)  output tile  (batch dim squeezed out)
    # acc_ref: (tm, tn)  f32 accumulator, persists across the K grid axis
    k = pl.program_id(3)

    @pl.when(k == 0)
    def _():
        acc_ref[...] = jnp.zeros_like(acc_ref)

    acc_ref[...] += jnp.dot(p_ref[...], w_ref[...],
                            preferred_element_type=jnp.float32)

    @pl.when(k == pl.num_programs(3) - 1)
    def _():
        o_ref[...] = acc_ref[...].astype(o_ref.dtype)


def downsample_pallas(x_nchw, w_oihw, *, compute_dtype=jnp.bfloat16):
    """Conv2d(in_ch, 2*in_ch, kernel_size=4, stride=2, padding=1, bias=False).

    x_nchw: [B, C, H, W]
    w_oihw: [2C, C, 4, 4]   (PyTorch OIHW layout)
    returns: [B, 2C, H//2, W//2]  in x's dtype (accumulation always f32)
    """
    B, C, H, W = x_nchw.shape
    OC = w_oihw.shape[0]
    KH = KW = 4
    Ho, Wo = H // 2, W // 2
    M = Ho * Wo
    K = KH * KW * C
    out_dtype = x_nchw.dtype

    # ---- glue: NCHW -> NHWC, pad, im2col (patch extraction) ----
    # TODO(synk): fold the im2col into the kernel (halo'd BlockSpec or 16-tap
    # accumulation) to avoid materializing the 4x-inflated patch tensor in HBM.
    x = jnp.transpose(x_nchw, (0, 2, 3, 1))               # [B, H, W, C]
    x_pad = jnp.pad(x, ((0, 0), (1, 1), (1, 1), (0, 0)))  # padding=1

    taps = []
    for kh in range(KH):
        for kw in range(KW):
            sl = lax.slice(
                x_pad,
                (0, kh, kw, 0),
                (B, kh + 2 * (Ho - 1) + 1, kw + 2 * (Wo - 1) + 1, C),
                (1, 2, 2, 1),
            )  # [B, Ho, Wo, C]
            taps.append(sl)
    # patch layout: K index = (kh*KW + kw)*C + c
    patches = jnp.stack(taps, axis=3).reshape(B, M, K)

    # weight OIHW -> (kh, kw, c, oc) -> [K, OC], matching patch K ordering
    w_mat = jnp.transpose(w_oihw, (2, 3, 1, 0)).reshape(K, OC)

    # ---- tile sizes (kept small enough for v7x's 64 MiB VMEM, 128-aligned
    # lanes for the MXU and unmasked stores) ----
    tm = min(256, _round_up(M, 8))          # sublane-aligned M tile
    tn = min(256, _round_up(OC, 128))       # lane-dense output channels
    tk = min(512, _round_up(K, 128))        # K tile (reduction axis)
    M_pad = _round_up(M, tm)
    OC_pad = _round_up(OC, tn)
    K_pad = _round_up(K, tk)

    patches = jnp.pad(
        patches, ((0, 0), (0, M_pad - M), (0, K_pad - K))).astype(compute_dtype)
    w_mat = jnp.pad(
        w_mat, ((0, K_pad - K), (0, OC_pad - OC))).astype(compute_dtype)

    grid = (B, M_pad // tm, OC_pad // tn, K_pad // tk)

    in_isz = jnp.dtype(compute_dtype).itemsize
    out_isz = jnp.dtype(out_dtype).itemsize
    # double-buffered inputs + double-buffered output + f32 accumulator
    vmem_needed = (2 * (tm * tk + tk * tn) * in_isz
                   + 2 * tm * tn * out_isz + tm * tn * 4)
    vmem_limit = int(min(max(2 * vmem_needed, 16 << 20), 48 << 20))

    cost = pl.CostEstimate(
        flops=2 * B * M_pad * K_pad * OC_pad,
        transcendentals=0,
        bytes_accessed=(patches.size * in_isz + w_mat.size * in_isz
                        + B * M_pad * OC_pad * out_isz),
    )

    out_flat = pl.pallas_call(
        _conv_matmul_kernel,
        out_shape=jax.ShapeDtypeStruct((B, M_pad, OC_pad), out_dtype),
        grid_spec=pltpu.PrefetchScalarGridSpec(
            num_scalar_prefetch=0,
            grid=grid,
            in_specs=[
                # patches: batch dim squeezed, tile over (M, K)
                pl.BlockSpec((pl.Squeezed(), tm, tk),
                             lambda b, i, j, k: (b, i, k)),
                # weight: independent of b and the M tile -> stays resident
                pl.BlockSpec((tk, tn),
                             lambda b, i, j, k: (k, j)),
            ],
            out_specs=pl.BlockSpec((pl.Squeezed(), tm, tn),
                                   lambda b, i, j, k: (b, i, j)),
            scratch_shapes=[pltpu.VMEM((tm, tn), jnp.float32)],
        ),
        compiler_params=pltpu.CompilerParams(
            dimension_semantics=("parallel", "parallel", "parallel", "arbitrary"),
            vmem_limit_bytes=vmem_limit,
        ),
        cost_estimate=cost,
    )(patches, w_mat)

    # ---- glue: strip padding, back to NCHW ----
    out = out_flat[:, :M, :OC].reshape(B, Ho, Wo, OC)      # NHWC
    return jnp.transpose(out, (0, 3, 1, 2))                # NCHW


if __name__ == "__main__":
    key = jax.random.PRNGKey(0)
    kx, kw = jax.random.split(key)

    B, C, H, W = 2, 4, 16, 16
    x = jax.random.normal(kx, (B, C, H, W), dtype=jnp.float32)
    # Conv2d(in_channels=C, out_channels=2C, kernel_size=4) weight: [2C, C, 4, 4]
    w = jax.random.normal(kw, (2 * C, C, 4, 4), dtype=jnp.float32) * 0.1

    # reference: XLA conv, same semantics as nn.Conv2d(C, 2C, 4, 2, 1, bias=False)
    ref = lax.conv_general_dilated(
        x, w,
        window_strides=(2, 2),
        padding=((1, 1), (1, 1)),
        dimension_numbers=("NCHW", "OIHW", "NCHW"),
    )

    # default path: bf16 MXU inputs, f32 accumulation
    out_bf16 = jax.block_until_ready(downsample_pallas(x, w))
    assert out_bf16.shape == (B, 2 * C, H // 2, W // 2), out_bf16.shape
    assert jnp.allclose(out_bf16, ref, atol=5e-2, rtol=5e-2), \
        float(jnp.max(jnp.abs(out_bf16 - ref)))

    # full-precision path: bit-for-bit-ish match to the XLA conv
    out_f32 = jax.block_until_ready(
        downsample_pallas(x, w, compute_dtype=jnp.float32))
    assert jnp.allclose(out_f32, ref, atol=1e-4, rtol=1e-4), \
        float(jnp.max(jnp.abs(out_f32 - ref)))

    print("KERNEL_OK")
</pallas_src>

<mosaic_0001>
module attributes {stable_mosaic.version = 11 : i64} {
  func.func @_conv_matmul_kernel(%arg0: i32, %arg1: i32, %arg2: i32, %arg3: i32, %arg4: memref<1x64x128xbf16, #tpu.memory_space<vmem>>, %arg5: memref<128x128xbf16, #tpu.memory_space<vmem>>, %arg6: memref<1x64x128xf32, #tpu.memory_space<vmem>>, %arg7: memref<64x128xf32, #tpu.memory_space<vmem>>) attributes {dimension_semantics = [#tpu.dimension_semantics<parallel>, #tpu.dimension_semantics<parallel>, #tpu.dimension_semantics<parallel>, #tpu.dimension_semantics<arbitrary>], iteration_bounds = array<i64: 2, 1, 1, 1>, scalar_prefetch = 0 : i64, scratch_operands = 1 : i64, tpu.core_type = #tpu.core_type<tc>, window_params = [{transform_indices = @transform_0, window_bounds = array<i64: 1, 64, 128>}, {transform_indices = @transform_1, window_bounds = array<i64: 128, 128>}, {transform_indices = @transform_2, window_bounds = array<i64: 1, 64, 128>}]} {
    %c0_i32 = arith.constant 0 : i32
    %0 = arith.cmpi eq, %arg3, %c0_i32 : i32
    %1 = arith.extui %0 : i1 to i32
    %c0_i32_0 = arith.constant 0 : i32
    %2 = arith.cmpi ne, %1, %c0_i32_0 : i32
    scf.if %2 {
      %cst_11 = arith.constant 0.000000e+00 : f32
      %13 = vector.broadcast %cst_11 : f32 to vector<64x128xf32>
      %c0_12 = arith.constant 0 : index
      %c0_13 = arith.constant 0 : index
      %14 = vector.load %arg7[%c0_12, %c0_13] : memref<64x128xf32, #tpu.memory_space<vmem>>, vector<64x128xf32>
      tpu.vector_store %arg7[%c0_12, %c0_13], %13 {strides = array<i32>} : memref<64x128xf32, #tpu.memory_space<vmem>>, vector<64x128xf32>,
    } else {
    }
    %c0 = arith.constant 0 : index
    %c0_1 = arith.constant 0 : index
    %3 = vector.load %arg7[%c0, %c0_1] : memref<64x128xf32, #tpu.memory_space<vmem>>, vector<64x128xf32>
    %c0_2 = arith.constant 0 : index
    %c0_3 = arith.constant 0 : index
    %c0_4 = arith.constant 0 : index
    %4 = vector.load %arg4[%c0_2, %c0_3, %c0_4] : memref<1x64x128xbf16, #tpu.memory_space<vmem>>, vector<1x64x128xbf16>
    %5 = vector.shape_cast %4 : vector<1x64x128xbf16> to vector<64x128xbf16>
    %c0_5 = arith.constant 0 : index
    %c0_6 = arith.constant 0 : index
    %6 = vector.load %arg5[%c0_5, %c0_6] : memref<128x128xbf16, #tpu.memory_space<vmem>>, vector<128x128xbf16>
    %cst = arith.constant dense<0.000000e+00> : vector<64x128xf32>
    %7 = tpu.matmul %5, %6, %cst {dimension_numbers = #tpu.dot_dimension_numbers<[1], [0], [0], [1], [0, 0, 1, 1], [], []>} : vector<64x128xbf16>, vector<128x128xbf16>, vector<64x128xf32> -> vector<64x128xf32>
    %8 = arith.addf %3, %7 : vector<64x128xf32>
    %c0_7 = arith.constant 0 : index
    %c0_8 = arith.constant 0 : index
    %9 = vector.load %arg7[%c0_7, %c0_8] : memref<64x128xf32, #tpu.memory_space<vmem>>, vector<64x128xf32>
    tpu.vector_store %arg7[%c0_7, %c0_8], %8 {strides = array<i32>} : memref<64x128xf32, #tpu.memory_space<vmem>>, vector<64x128xf32>,
    %c0_i32_9 = arith.constant 0 : i32
    %10 = arith.cmpi eq, %arg3, %c0_i32_9 : i32
    %11 = arith.extui %10 : i1 to i32
    %c0_i32_10 = arith.constant 0 : i32
    %12 = arith.cmpi ne, %11, %c0_i32_10 : i32
    scf.if %12 {
      %c0_11 = arith.constant 0 : index
      %c0_12 = arith.constant 0 : index
      %13 = vector.load %arg7[%c0_11, %c0_12] : memref<64x128xf32, #tpu.memory_space<vmem>>, vector<64x128xf32>
      %c0_13 = arith.constant 0 : index
      %c0_14 = arith.constant 0 : index
      %c0_15 = arith.constant 0 : index
      %14 = vector.load %arg6[%c0_13, %c0_14, %c0_15] : memref<1x64x128xf32, #tpu.memory_space<vmem>>, vector<1x64x128xf32>
      %15 = vector.shape_cast %14 : vector<1x64x128xf32> to vector<64x128xf32>
      %16 = vector.shape_cast %13 : vector<64x128xf32> to vector<1x64x128xf32>
      tpu.vector_store %arg6[%c0_13, %c0_14, %c0_15], %16 {strides = array<i32>} : memref<1x64x128xf32, #tpu.memory_space<vmem>>, vector<1x64x128xf32>,
    } else {
    }
    return
  }
  func.func @transform_0(%arg0: i32, %arg1: i32, %arg2: i32, %arg3: i32) -> (i32, i32, i32) {
    %c0_i32 = arith.constant 0 : i32
    return %arg0, %arg1, %arg3 : i32, i32, i32
  }
  func.func @transform_1(%arg0: i32, %arg1: i32, %arg2: i32, %arg3: i32) -> (i32, i32) {
    %c0_i32 = arith.constant 0 : i32
    return %arg3, %arg2 : i32, i32
  }
  func.func @transform_2(%arg0: i32, %arg1: i32, %arg2: i32, %arg3: i32) -> (i32, i32, i32) {
    %c0_i32 = arith.constant 0 : i32
    return %arg0, %arg1, %arg2 : i32, i32, i32
  }
}

</mosaic_0001>

<llo_original>
// kernel: tpu_custom_call.1
$region0: #{tpu_custom_call.1}
  #allocation0 [shape = 'u32[]', space=smem, size = 0x4, offset = 0x4, fixed_abs, tag = 'smem constant byte address 0x4 - core index']
  #allocation1 [shape = 'u32[72,128]{1,0:T(1,128)}', space=vmem, size = 0x9000, scoped, tag = 'internal scratch']
  #allocation2 [shape = 'f32[64,128]{1,0:T(8,128)}', space=vmem, size = 0x8000, scoped, tag = 'scratch operand']
  %s0 = inlined_call_operand.hbm [shape: bf16[2,64,128], index: 0, kind: input, shape index: {}]
  %s1 = inlined_call_operand.hbm [shape: bf16[128,128], index: 1, kind: input, shape index: {}]
  %s2 = inlined_call_operand.hbm [shape: f32[2,64,128], index: 2, kind: output, shape index: {}]
  %s3 = sld [smem:[#allocation0]]
  $region57: #{tpu_custom_call.1} parent=0
    _
  %s5 = ssub.s32 1, %s3
  %s6 = scalar_select 0, %s5, %s3
  $region1: #{tpu_custom_call.1} parent=0
    #allocation3 [shape = 'u8[32768]{0}', space=vmem, size = 0x8000, scoped, tag = 'input window, operand 0']
    #allocation4 [shape = 's32[2]{0}', space=sflag, size = 0x8, scoped, tag = 'scoped memory for tpu_custom_call.1']
    #allocation5 [shape = 's32[2]{0}', space=sflag, size = 0x8, scoped, tag = 'scoped memory for tpu_custom_call.1']
    #allocation6 [shape = 'u8[32768]{0}', space=vmem, size = 0x8000, scoped, tag = 'input window, operand 1, single buffered']
    #allocation7 [shape = 's32[1]{0}', space=sflag, size = 0x4, scoped, tag = 'scoped memory for tpu_custom_call.1']
    #allocation8 [shape = 'u8[65536]{0}', space=vmem, size = 0x10000, scoped, tag = 'output window, operand 0']
    %7 = vsyncpa [#allocation4], 0
    %s8 = scalar_lea.sflag [#allocation4], 1
    %9 = vsyncpa %s8, 0
    %10 = vsyncpa [#allocation7], 0
    %11 = vsyncpa [#allocation5], 0
    %s12 = scalar_lea.sflag [#allocation5], 1
    %13 = vsyncpa %s12, 0
    loop: start=0, step=1, limit=4
    $region2: #{tpu_custom_call.1} parent=1 // loop_pre_header
      _
    $region3: #{tpu_custom_call.1} parent=1 // loop_header
      %s15 = sphi 0, %s19
      %p16 = scmp.ge.s32.totalorder %s15, 4
      %s22 = sphi 0, %s48
      %s23 = sphi 0, %s44
      %s24 = sphi 0, %s40
      %s25 = sphi 0, %s36
      %s26 = sphi 0, %s22
      %s27 = sphi 0, %s23
      %s28 = sphi 0, %s24
      %s29 = sphi 0, %s25
      %s30 = sphi 0, %s26
      %s31 = sphi 0, %s27
      %s32 = sphi 0, %s28
      %s33 = sphi 0, %s29
      %s55 = sphi 0, %s57
      %s58 = sphi 0, %s55
      %s59 = sphi 0, %s58
      %s75 = sphi 0, %s59
      %s83 = sphi 0, %s85
      %s86 = sphi 0, %s83
      %s87 = sphi 0, %s86
      %s103 = sphi 0, %s87
      %s113 = sphi 0, %s115
      %s116 = sphi 0, %s113
      %s117 = sphi 0, %s116
      %s133 = sphi 0, %s117
    $region4: #{tpu_custom_call.1} parent=1 // loop_header_branch
      %18 = sbr.rel (%p16) target = $region8
    $region5: #{tpu_custom_call.1} parent=1 // loop_body
      %s20 = ssub.s32 %s15, 1
      %s21 = ssub.s32 %s15, 2
      %s34 = sadd.s32 1, %s25
      %p35 = scmp.ge.s32.totalorder %s34, 1
      %s36 = scalar_select %p35, 0, %s34
      %s37 = sadd.s32 1, %s24
      %s38 = scalar_select %p35, %s37, %s24
      %p39 = scmp.ge.s32.totalorder %s38, 1
      %s40 = scalar_select %p39, 0, %s38
      %s41 = sadd.s32 1, %s23
      %s42 = scalar_select %p39, %s41, %s23
      %p43 = scmp.ge.s32.totalorder %s42, 1
      %s44 = scalar_select %p43, 0, %s42
      %s45 = sadd.s32 1, %s22
      %s46 = scalar_select %p43, %s45, %s22
      %p47 = scmp.ge.s32.totalorder %s46, 2
      %s48 = scalar_select %p47, 0, %s46
      %s49 = ssub.s32 %s22, %s48
      %s50 = ssub.s32 %s23, %s44
      %s51 = sor.u32 %s49, %s50
      %s52 = ssub.s32 %s25, %s36
      %s53 = sor.u32 %s51, %s52
      %p54 = scmp.eq.s32.totalorder %s53, 0
      %s56 = sadd.s32 %s55, 1
      %s57 = scalar_select %p54, %s55, %s56
      %p60 = pneg %p54
      %p61 = scmp.eq.s32.totalorder %s15, 1
      %p62 = por %p60, %p61
      %p63 = scmp.ne.s32.totalorder %s55, %s58
      %p64 = scmp.eq.s32.totalorder %s15, 0
      %p65 = por %p63, %p64
      %p66 = scmp.ne.s32.totalorder %s55, %s58
      %p67 = scmp.eq.s32.totalorder %s20, 1
      %p68 = por %p66, %p67
      %p69 = scmp.ne.s32.totalorder %s58, %s59
      %p70 = scmp.eq.s32.totalorder %s20, 0
      %p71 = por %p69, %p70
      %p72 = scmp.ne.s32.totalorder %s58, %s59
      %p73 = scmp.eq.s32.totalorder %s21, 1
      %p74 = por %p72, %p73
      %p76 = scmp.ne.s32.totalorder %s59, %s75
      %p77 = scmp.eq.s32.totalorder %s21, 0
      %p78 = por %p76, %p77
      %s79 = ssub.s32 %s25, %s36
      %s80 = ssub.s32 %s24, %s40
      %s81 = sor.u32 %s79, %s80
      %p82 = scmp.eq.s32.totalorder %s81, 0
      %s84 = sadd.s32 %s83, 1
      %s85 = scalar_select %p82, %s83, %s84
      %p88 = pneg %p82
      %p89 = scmp.eq.s32.totalorder %s15, 1
      %p90 = por %p88, %p89
      %p91 = scmp.ne.s32.totalorder %s83, %s86
      %p92 = scmp.eq.s32.totalorder %s15, 0
      %p93 = por %p91, %p92
      %p94 = scmp.ne.s32.totalorder %s83, %s86
      %p95 = scmp.eq.s32.totalorder %s20, 1
      %p96 = por %p94, %p95
      %p97 = scmp.ne.s32.totalorder %s86, %s87
      %p98 = scmp.eq.s32.totalorder %s20, 0
      %p99 = por %p97, %p98
      %p100 = scmp.ne.s32.totalorder %s86, %s87
      %p101 = scmp.eq.s32.totalorder %s21, 1
      %p102 = por %p100, %p101
      %p104 = scmp.ne.s32.totalorder %s87, %s103
      %p105 = scmp.eq.s32.totalorder %s21, 0
      %p106 = por %p104, %p105
      %s107 = ssub.s32 %s22, %s48
      %s108 = ssub.s32 %s23, %s44
      %s109 = sor.u32 %s107, %s108
      %s110 = ssub.s32 %s24, %s40
      %s111 = sor.u32 %s109, %s110
      %p112 = scmp.eq.s32.totalorder %s111, 0
      %s114 = sadd.s32 %s113, 1
      %s115 = scalar_select %p112, %s113, %s114
      %p118 = pneg %p112
      %p119 = scmp.eq.s32.totalorder %s15, 1
      %p120 = por %p118, %p119
      %p121 = scmp.ne.s32.totalorder %s113, %s116
      %p122 = scmp.eq.s32.totalorder %s15, 0
      %p123 = por %p121, %p122
      %p124 = scmp.ne.s32.totalorder %s113, %s116
      %p125 = scmp.eq.s32.totalorder %s20, 1
      %p126 = por %p124, %p125
      %p127 = scmp.ne.s32.totalorder %s116, %s117
      %p128 = scmp.eq.s32.totalorder %s20, 0
      %p129 = por %p127, %p128
      %p130 = scmp.ne.s32.totalorder %s116, %s117
      %p131 = scmp.eq.s32.totalorder %s21, 1
      %p132 = por %p130, %p131
      %p134 = scmp.ne.s32.totalorder %s117, %s133
      %p135 = scmp.eq.s32.totalorder %s21, 0
      %p136 = por %p134, %p135
      %p137 = scmp.le.s32.totalorder 1, %s15
      %p138 = scmp.lt.s32.totalorder %s15, 3
      %p139 = pnand %p137, %p138
      %p140 = pneg %p139
      // Predicated region
      $region9: #{tpu_custom_call.1} parent=5 // pred_check
        _
      $region10: #{tpu_custom_call.1} parent=5 // pred_check_branch
        %142 = sbr.rel (%p139) target = $region12
      $region11: #{tpu_custom_call.1} parent=5 // pred_region
        %s143 = ssub.s32 %s15, 1
        // Predicated region
        $region13: #{tpu_custom_call.1} parent=11 // pred_check
          %p144 = pneg %p99
        $region14: #{tpu_custom_call.1} parent=11 // pred_check_branch
          %146 = sbr.rel (%p144) target = $region16
        $region15: #{tpu_custom_call.1} parent=11 // pred_region
          %s147 = smul.u32 16, %s29
          %149 = vsyncadd [#allocation7], 0
          %s150 = sadd.s32 %s28, %s147
          %s151 = smul.addr %s150, 4
          %s152 = scalar_lea.hbm %s1, %s151
          %s153 = sshll.u32 %s152, 4
          %s154 = int_to_ptr.hbm [resolvable:$true] %s153
          %s155 = sshll.u32 [#allocation6], 4
          %s156 = int_to_ptr.vmem [resolvable:$true] %s155
          %161 = dma.hbm_to_vmem [thread:$0]  %s154, 1024, %s156, [#allocation7], 64, 64, 4
        $region16: #{tpu_custom_call.1} parent=11 // pred_fallthru
          _
      $region12: #{tpu_custom_call.1} parent=5 // pred_fallthru
        _
      %p162 = scmp.lt.s32.totalorder %s15, 2
      // Predicated region
      $region17: #{tpu_custom_call.1} parent=5 // pred_check
        %p163 = pneg %p162
      $region18: #{tpu_custom_call.1} parent=5 // pred_check_branch
        %165 = sbr.rel (%p163) target = $region20
      $region19: #{tpu_custom_call.1} parent=5 // pred_region
        // Predicated region
        $region21: #{tpu_custom_call.1} parent=19 // pred_check
          %p166 = pneg %p65
        $region22: #{tpu_custom_call.1} parent=19 // pred_check_branch
          %168 = sbr.rel (%p166) target = $region24
        $region23: #{tpu_custom_call.1} parent=19 // pred_region
          %s169 = sand.u32 %s55, 1
          %s170 = scalar_lea.sflag [#allocation4], %s169
          %s171 = sand.u32 %s55, 1
          %s172 = smul.addr %s171, 32
          %s173 = scalar_lea.vmem [#allocation3], %s172
          %s174 = smul.u32 8, %s23
          %176 = vsyncadd %s170, 0
          %s177 = sadd.s32 %s25, %s174
          %s178 = smul.addr %s22, 8
          %s179 = sadd.s32 %s177, %s178
          %s180 = smul.addr %s179, 4
          %s181 = scalar_lea.hbm %s0, %s180
          %s182 = sshll.u32 %s181, 4
          %s183 = int_to_ptr.hbm [resolvable:$true] %s182
          %s184 = sshll.u32 %s173, 4
          %s185 = int_to_ptr.vmem [resolvable:$true] %s184
          %190 = dma.hbm_to_vmem [thread:$0]  %s183, 512, %s185, %s170, 64, 64, 4
        $region24: #{tpu_custom_call.1} parent=19 // pred_fallthru
          _
      $region20: #{tpu_custom_call.1} parent=5 // pred_fallthru
        _
      %p191 = scmp.le.s32.totalorder 1, %s15
      %p192 = scmp.lt.s32.totalorder %s15, 3
      %p193 = pnand %p191, %p192
      %p194 = pneg %p193
      // Predicated region
      $region25: #{tpu_custom_call.1} parent=5 // pred_check
        _
      $region26: #{tpu_custom_call.1} parent=5 // pred_check_branch
        %196 = sbr.rel (%p193) target = $region28
      $region27: #{tpu_custom_call.1} parent=5 // pred_region
        %s197 = ssub.s32 %s15, 1
        %s198 = sand.u32 %s58, 1
        %s199 = scalar_lea.sflag [#allocation4], %s198
        %s200 = sand.u32 %s58, 1
        %s201 = smul.addr %s200, 32
        %s202 = scalar_lea.vmem [#allocation3], %s201
        // Predicated region
        $region29: #{tpu_custom_call.1} parent=27 // pred_check
          %p203 = pneg %p71
        $region30: #{tpu_custom_call.1} parent=27 // pred_check_branch
          %205 = sbr.rel (%p203) target = $region32
        $region31: #{tpu_custom_call.1} parent=27 // pred_region
          %207 = dma.done %s199, 512
        $region32: #{tpu_custom_call.1} parent=27 // pred_fallthru
          _
        // Predicated region
        $region33: #{tpu_custom_call.1} parent=27 // pred_check
          %p208 = pneg %p99
        $region34: #{tpu_custom_call.1} parent=27 // pred_check_branch
          %210 = sbr.rel (%p208) target = $region36
        $region35: #{tpu_custom_call.1} parent=27 // pred_region
          %212 = dma.done [#allocation7], 1024
        $region36: #{tpu_custom_call.1} parent=27 // pred_fallthru
          _
        %s213 = sand.u32 %s58, 1
        %s214 = scalar_lea.sflag [#allocation4], %s213
        %s215 = sand.u32 %s58, 1
        %s216 = smul.addr %s215, 32
        %s217 = scalar_lea.vmem [#allocation3], %s216
        %p218 = pneg %p71
        %p219 = pneg %p68
        %p220 = pneg %p99
        %p221 = pneg %p96
        %p222 = pneg %p129
        %p223 = pneg %p126
        %s224 = sand.u32 %s116, 1
        %s225 = scalar_lea.sflag [#allocation5], %s224
        %s226 = sand.u32 %s116, 1
        %s227 = smul.addr %s226, 64
        %s228 = scalar_lea.vmem [#allocation8], %s227
        %s229 = smul.u32 8, %s27
        %s230 = smul.u32 16, %s29
        %s231 = smul.u32 8, %s27
        %p232 = scmp.eq.s32.totalorder %s29, 0
        // Predicated region
        $region37: #{tpu_custom_call.1} parent=27 // pred_check
          %p233 = pneg %p232
        $region38: #{tpu_custom_call.1} parent=27 // pred_check_branch
          %235 = sbr.rel (%p233) target = $region40
        $region39: #{tpu_custom_call.1} parent=27 // pred_region
          %236 = vst [vmem:[#allocation2] sm:$0xff] 0.0
          %237 = vst [vmem:[#allocation2 + $0x8] sm:$0xff] 0.0
          %238 = vst [vmem:[#allocation2 + $0x10] sm:$0xff] 0.0
          %239 = vst [vmem:[#allocation2 + $0x18] sm:$0xff] 0.0
          %240 = vst [vmem:[#allocation2 + $0x20] sm:$0xff] 0.0
          %241 = vst [vmem:[#allocation2 + $0x28] sm:$0xff] 0.0
          %242 = vst [vmem:[#allocation2 + $0x30] sm:$0xff] 0.0
          %243 = vst [vmem:[#allocation2 + $0x38] sm:$0xff] 0.0
        $region40: #{tpu_custom_call.1} parent=27 // pred_fallthru
          _
        %v244 = vld [vmem:[#allocation2] sm:$0xff]
        %v245 = vld [vmem:[#allocation2 + $0x8] sm:$0xff]
        %v246 = vld [vmem:[#allocation2 + $0x10] sm:$0xff]
        %v247 = vld [vmem:[#allocation2 + $0x18] sm:$0xff]
        %v248 = vld [vmem:[#allocation2 + $0x20] sm:$0xff]
        %v249 = vld [vmem:[#allocation2 + $0x28] sm:$0xff]
        %v250 = vld [vmem:[#allocation2 + $0x30] sm:$0xff]
        %v251 = vld [vmem:[#allocation2 + $0x38] sm:$0xff]
        %v252 = vld [vmem:[%s202] sm:$0xf]
        %v253 = vld [vmem:[%s202 + $0x4] sm:$0xf]
        %v254 = vld [vmem:[%s202 + $0x8] sm:$0xf]
        %v255 = vld [vmem:[%s202 + $0xc] sm:$0xf]
        %v256 = vld [vmem:[%s202 + $0x10] sm:$0xf]
        %v257 = vld [vmem:[%s202 + $0x14] sm:$0xf]
        %v258 = vld [vmem:[%s202 + $0x18] sm:$0xf]
        %v259 = vld [vmem:[%s202 + $0x1c] sm:$0xf]
        %v260 = vld [vmem:[#allocation6] sm:$0xf]
        %v261 = vld [vmem:[#allocation6 + $0x4] sm:$0xf]
        %v262 = vld [vmem:[#allocation6 + $0x8] sm:$0xf]
        %v263 = vld [vmem:[#allocation6 + $0xc] sm:$0xf]
        %v264 = vld [vmem:[#allocation6 + $0x10] sm:$0xf]
        %v265 = vld [vmem:[#allocation6 + $0x14] sm:$0xf]
        %v266 = vld [vmem:[#allocation6 + $0x18] sm:$0xf]
        %v267 = vld [vmem:[#allocation6 + $0x1c] sm:$0xf]
        %v268 = vld [vmem:[#allocation6 + $0x20] sm:$0xf]
        %v269 = vld [vmem:[#allocation6 + $0x24] sm:$0xf]
        %v270 = vld [vmem:[#allocation6 + $0x28] sm:$0xf]
        %v271 = vld [vmem:[#allocation6 + $0x2c] sm:$0xf]
        %v272 = vld [vmem:[#allocation6 + $0x30] sm:$0xf]
        %v273 = vld [vmem:[#allocation6 + $0x34] sm:$0xf]
        %v274 = vld [vmem:[#allocation6 + $0x38] sm:$0xf]
        %v275 = vld [vmem:[#allocation6 + $0x3c] sm:$0xf]
        %v284 = vunpack.c.l.b16 %v252
        %v285 = vunpack.c.l.b16 %v253
        %v286 = vunpack.c.l.b16 %v254
        %v287 = vunpack.c.l.b16 %v255
        %v288 = vunpack.c.l.b16 %v256
        %v289 = vunpack.c.l.b16 %v257
        %v290 = vunpack.c.l.b16 %v258
        %v291 = vunpack.c.l.b16 %v259
        %v292 = vpack.c.b16 %v285, %v284
        %v293 = vpack.c.b16 %v287, %v286
        %v294 = vpack.c.b16 %v289, %v288
        %v295 = vpack.c.b16 %v291, %v290
        %v316 = vunpack.c.l.b16 %v260
        %v317 = vunpack.c.l.b16 %v261
        %v318 = vunpack.c.l.b16 %v262
        %v319 = vunpack.c.l.b16 %v263
        %v320 = vunpack.c.l.b16 %v264
        %v321 = vunpack.c.l.b16 %v265
        %v322 = vunpack.c.l.b16 %v266
        %v323 = vunpack.c.l.b16 %v267
        %v324 = vunpack.c.l.b16 %v268
        %v325 = vunpack.c.l.b16 %v269
        %v326 = vunpack.c.l.b16 %v270
        %v327 = vunpack.c.l.b16 %v271
        %v328 = vunpack.c.l.b16 %v272
        %v329 = vunpack.c.l.b16 %v273
        %v330 = vunpack.c.l.b16 %v274
        %v331 = vunpack.c.l.b16 %v275
        %v332 = vpack.c.b16 %v317, %v316
        %v333 = vpack.c.b16 %v319, %v318
        %v334 = vpack.c.b16 %v321, %v320
        %v335 = vpack.c.b16 %v323, %v322
        %v336 = vpack.c.b16 %v325, %v324
        %v337 = vpack.c.b16 %v327, %v326
        %v338 = vpack.c.b16 %v329, %v328
        %v339 = vpack.c.b16 %v331, %v330
        %348 = vmatpush.bf16.msra.mxu0 %v339
        %349 = vmatpush.bf16.msra.mxu0 %v338
        %350 = vmatpush.bf16.msra.mxu0 %v337
        %351 = vmatpush.bf16.msra.mxu0 %v336
        %352 = vmatpush.bf16.msra.mxu0 %v335
        %353 = vmatpush.bf16.msra.mxu0 %v334
        %354 = vmatpush.bf16.msra.mxu0 %v333
        %355 = vmatpush.bf16.msra.mxu0 %v332
        %356 = vmatmul.bf16.gmra.mxu0 %v292
        %v357 = vpop.f32.mrf.mxu0
        %v358 = vadd.f32 0.0, %v357
        %v359 = vpop.f32.mrf.mxu0
        %v360 = vadd.f32 0.0, %v359
        %361 = vmatmul.bf16.gmra.mxu0 %v293
        %v362 = vpop.f32.mrf.mxu0
        %v363 = vadd.f32 0.0, %v362
        %v364 = vpop.f32.mrf.mxu0
        %v365 = vadd.f32 0.0, %v364
        %366 = vmatmul.bf16.gmra.mxu0 %v294
        %v367 = vpop.f32.mrf.mxu0
        %v368 = vadd.f32 0.0, %v367
        %v369 = vpop.f32.mrf.mxu0
        %v370 = vadd.f32 0.0, %v369
        %371 = vmatmul.bf16.gmra.mxu0 %v295
        %v372 = vpop.f32.mrf.mxu0
        %v373 = vadd.f32 0.0, %v372
        %v374 = vpop.f32.mrf.mxu0
        %v375 = vadd.f32 0.0, %v374
        %376 = vdwg.mxu0
        %v377 = vadd.f32 %v244, %v358
        %v378 = vadd.f32 %v245, %v360
        %v379 = vadd.f32 %v246, %v363
        %v380 = vadd.f32 %v247, %v365
        %v381 = vadd.f32 %v248, %v368
        %v382 = vadd.f32 %v249, %v370
        %v383 = vadd.f32 %v250, %v373
        %v384 = vadd.f32 %v251, %v375
        %385 = vst [vmem:[#allocation2] sm:$0xff] %v377
        %386 = vst [vmem:[#allocation2 + $0x8] sm:$0xff] %v378
        %387 = vst [vmem:[#allocation2 + $0x10] sm:$0xff] %v379
        %388 = vst [vmem:[#allocation2 + $0x18] sm:$0xff] %v380
        %389 = vst [vmem:[#allocation2 + $0x20] sm:$0xff] %v381
        %390 = vst [vmem:[#allocation2 + $0x28] sm:$0xff] %v382
        %391 = vst [vmem:[#allocation2 + $0x30] sm:$0xff] %v383
        %392 = vst [vmem:[#allocation2 + $0x38] sm:$0xff] %v384
        // Predicated region
        $region41: #{tpu_custom_call.1} parent=27 // pred_check
          %p393 = pneg %p232
        $region42: #{tpu_custom_call.1} parent=27 // pred_check_branch
          %395 = sbr.rel (%p393) target = $region44
        $region43: #{tpu_custom_call.1} parent=27 // pred_region
          %v396 = vld [vmem:[#allocation2] sm:$0xff]
          %v397 = vld [vmem:[#allocation2 + $0x8] sm:$0xff]
          %v398 = vld [vmem:[#allocation2 + $0x10] sm:$0xff]
          %v399 = vld [vmem:[#allocation2 + $0x18] sm:$0xff]
          %v400 = vld [vmem:[#allocation2 + $0x20] sm:$0xff]
          %v401 = vld [vmem:[#allocation2 + $0x28] sm:$0xff]
          %v402 = vld [vmem:[#allocation2 + $0x30] sm:$0xff]
          %v403 = vld [vmem:[#allocation2 + $0x38] sm:$0xff]
          %404 = vst [vmem:[%s228] sm:$0xff] %v396
          %405 = vst [vmem:[%s228 + $0x8] sm:$0xff] %v397
          %406 = vst [vmem:[%s228 + $0x10] sm:$0xff] %v398
          %407 = vst [vmem:[%s228 + $0x18] sm:$0xff] %v399
          %408 = vst [vmem:[%s228 + $0x20] sm:$0xff] %v400
          %409 = vst [vmem:[%s228 + $0x28] sm:$0xff] %v401
          %410 = vst [vmem:[%s228 + $0x30] sm:$0xff] %v402
          %411 = vst [vmem:[%s228 + $0x38] sm:$0xff] %v403
        $region44: #{tpu_custom_call.1} parent=27 // pred_fallthru
          _
        %s412 = sand.u32 %s116, 1
        %s413 = scalar_lea.sflag [#allocation5], %s412
        %s414 = sand.u32 %s116, 1
        %s415 = smul.addr %s414, 64
        %s416 = scalar_lea.vmem [#allocation8], %s415
        // Predicated region
        $region45: #{tpu_custom_call.1} parent=27 // pred_check
          %p417 = pneg %p126
        $region46: #{tpu_custom_call.1} parent=27 // pred_check_branch
          %419 = sbr.rel (%p417) target = $region48
        $region47: #{tpu_custom_call.1} parent=27 // pred_region
          %s420 = smul.u32 8, %s27
          %422 = vsyncadd %s413, 0
          %s423 = sadd.s32 %s28, %s420
          %s424 = smul.addr %s26, 8
          %s425 = sadd.s32 %s423, %s424
          %s426 = smul.addr %s425, 8
          %s427 = scalar_lea.hbm %s2, %s426
          %s428 = sshll.u32 %s416, 4
          %s429 = int_to_ptr.vmem [resolvable:$true] %s428
          %s430 = sshll.u32 %s427, 4
          %s431 = int_to_ptr.hbm [resolvable:$true] %s430
          %436 = dma.vmem_to_hbm [thread:$0]  %s429, 1024, %s431, %s413, 128, 128, 8
        $region48: #{tpu_custom_call.1} parent=27 // pred_fallthru
          _
      $region28: #{tpu_custom_call.1} parent=5 // pred_fallthru
        _
      %p437 = scmp.le.s32.totalorder 2, %s15
      // Predicated region
      $region49: #{tpu_custom_call.1} parent=5 // pred_check
        %p438 = pneg %p437
      $region50: #{tpu_custom_call.1} parent=5 // pred_check_branch
        %440 = sbr.rel (%p438) target = $region52
      $region51: #{tpu_custom_call.1} parent=5 // pred_region
        %s441 = ssub.s32 %s15, 2
        // Predicated region
        $region53: #{tpu_custom_call.1} parent=51 // pred_check
          %p442 = pneg %p132
        $region54: #{tpu_custom_call.1} parent=51 // pred_check_branch
          %444 = sbr.rel (%p442) target = $region56
        $region55: #{tpu_custom_call.1} parent=51 // pred_region
          %s445 = sand.u32 %s117, 1
          %s446 = scalar_lea.sflag [#allocation5], %s445
          %s447 = sand.u32 %s117, 1
          %s448 = smul.addr %s447, 64
          %s449 = scalar_lea.vmem [#allocation8], %s448
          %451 = dma.done %s446, 1024
        $region56: #{tpu_custom_call.1} parent=51 // pred_fallthru
          _
      $region52: #{tpu_custom_call.1} parent=5 // pred_fallthru
        _
    $region6: #{tpu_custom_call.1} parent=1 // loop_footer
      %s19 = sadd.s32 1, %s15
    $region7: #{tpu_custom_call.1} parent=1 // loop_footer_branch
      %14 = sbr.rel target = $region3
    $region8: #{tpu_custom_call.1} parent=1 // loop_exit
      _
    %452 = vsyncpa [#allocation4], 1
    %s453 = scalar_lea.sflag [#allocation4], 1
    %454 = vsyncpa %s453, 1
    %455 = vsyncpa [#allocation7], 1
    %456 = vsyncpa [#allocation5], 1
    %s457 = scalar_lea.sflag [#allocation5], 1
    %458 = vsyncpa %s457, 1

</llo_original>
